<compile_context>
chip_gen: v7x
topology: tpu7x:2x2x1
jax: 0.10.0
libtpu: 0.0.40
codegen_flags: <defaults>
</compile_context>

<pallas_src>
import jax
import jax.numpy as jnp
import numpy as np
from jax import lax
from jax.experimental import pallas as pl
from jax.experimental.pallas import tpu as pltpu

DROP_P = 0.5        # nn.Dropout(p=0.5)
_LANE = 128         # lane width / MXU alignment
_TM = 256           # output-row tile (256 fills v6e/v7x MXU; multiple of 128 for v5e)


def _round_up(x, m):
    return ((x + m - 1) // m) * m


def _vmem_limit_bytes():
    """~3/4 of physical VMEM, capped at 96 MiB (v5e/v6e: 128 MiB phys, v7x: 64 MiB)."""
    try:
        cap = int(pltpu.get_tpu_info().vmem_capacity_bytes)
    except Exception:
        cap = 64 * 1024 * 1024    # conservative fallback (safe on every chip)
    return min((cap * 3) // 4, 96 * 1024 * 1024)


def _keep_mask(row_ids, col_ids, n_cols, seed):
    """Deterministic Bernoulli(1 - DROP_P) keep mask from a murmur-style integer hash
    of the *global* element index -> identical mask regardless of grid tiling."""
    idx = row_ids.astype(jnp.uint32) * jnp.uint32(n_cols) + col_ids.astype(jnp.uint32)
    z = idx + seed.astype(jnp.uint32) * jnp.uint32(0x9E3779B9)
    z = z ^ (z >> 16)
    z = z * jnp.uint32(0x7FEB352D)
    z = z ^ (z >> 15)
    z = z * jnp.uint32(0x846CA68B)
    z = z ^ (z >> 16)
    return (z & jnp.uint32(1)) == jnp.uint32(1)   # keep with prob 0.5


# --------------------------------------------------------------------------------------
# Stage 1: h = dropout(relu(x @ W + b)), tiled over row blocks.
# --------------------------------------------------------------------------------------
def _fc_relu_dropout_kernel(seed_ref, x_ref, w_ref, b_ref, h_ref):
    # x_ref: (TM, Kp) f32, w_ref: (Kp, Np) bf16, b_ref: (1, Np) f32, h_ref: (TM, Np) bf16
    x = x_ref[...].astype(jnp.bfloat16)            # in-kernel cast: hidden under the matmul
    acc = jnp.dot(x, w_ref[...], preferred_element_type=jnp.float32)
    acc = acc + b_ref[...]                         # bias broadcast over rows (f32 VPU)
    acc = jnp.maximum(acc, 0.0)                    # ReLU activation (f32 VPU)

    # Dropout(p=0.5), training semantics: drop w.p. p, scale kept by 1/(1-p).
    tm, n_out = h_ref.shape
    row0 = pl.program_id(0) * tm
    rows = lax.broadcasted_iota(jnp.int32, (tm, n_out), 0) + row0
    cols = lax.broadcasted_iota(jnp.int32, (tm, n_out), 1)
    keep = _keep_mask(rows, cols, n_out, seed_ref[0])
    acc = jnp.where(keep, acc * (1.0 / (1.0 - DROP_P)), 0.0)

    h_ref[...] = acc.astype(h_ref.dtype)           # bf16 for the stage-2 MXU


# --------------------------------------------------------------------------------------
# Stage 2: out = A @ h  (row-normalized mean aggregation), h fully resident in VMEM.
# --------------------------------------------------------------------------------------
def _aggregate_kernel(a_ref, h_ref, o_ref):
    # a_ref: (TM, Mp) bf16 row stripe of A; h_ref: (Mp, Np) bf16 resident; o_ref: (TM, Np) f32
    o_ref[...] = jnp.dot(a_ref[...], h_ref[...], preferred_element_type=jnp.float32)


# --------------------------------------------------------------------------------------
# Wrapper
# --------------------------------------------------------------------------------------
def graph_convolution(feats, weight, bias, agg, seed):
    """feats: (N, dim_in) f32; weight: (dim_in, dim_out) f32 (transpose of torch Linear);
    bias: (1, dim_out) f32; agg: (N, N) or pre-padded (Mp, Mp) row-normalized adjacency
    (bf16 preferred, padding rows/cols MUST be zero); seed: (1,) int32.
    Returns (N, dim_out) float32."""
    N, dim_in = feats.shape
    dim_out = weight.shape[1]

    Mp = _round_up(N, _TM)
    Kp = _round_up(dim_in, _LANE)
    Np = _round_up(dim_out, _LANE)
    vmem_limit = _vmem_limit_bytes()

    # Padded x rows produce nonzero h rows (dropout(relu(bias))); correctness relies on
    # the padded COLUMNS of A being zero so those rows never contribute to the output.
    xb = feats
    if xb.shape != (Mp, Kp):
        xb = jnp.pad(xb, ((0, Mp - xb.shape[0]), (0, Kp - xb.shape[1])))
    # x stays f32: cast to bf16 happens inside the kernel (no extra wrapper HBM pass).

    wb = jnp.pad(weight, ((0, Kp - dim_in), (0, Np - dim_out))).astype(jnp.bfloat16)
    bp = jnp.pad(bias, ((0, 0), (0, Np - dim_out))).astype(jnp.float32)

    ab = agg
    if ab.shape != (Mp, Mp):
        ab = jnp.pad(ab, ((0, Mp - ab.shape[0]), (0, Mp - ab.shape[1])))
    if ab.dtype != jnp.bfloat16:
        ab = ab.astype(jnp.bfloat16)

    # ---- stage 1: h = dropout(relu(x @ W + b)) -------------------------------------
    h = pl.pallas_call(
        _fc_relu_dropout_kernel,
        out_shape=jax.ShapeDtypeStruct((Mp, Np), jnp.bfloat16),
        grid_spec=pltpu.PrefetchScalarGridSpec(
            num_scalar_prefetch=1,                              # seed lands in SMEM
            grid=(Mp // _TM,),
            in_specs=[
                pl.BlockSpec((_TM, Kp), lambda i, s: (i, 0)),   # x row tile (f32)
                pl.BlockSpec((Kp, Np), lambda i, s: (0, 0),     # weight, resident
                             pipeline_mode=pl.Buffered(1)),
                pl.BlockSpec((1, Np), lambda i, s: (0, 0),      # bias, resident
                             pipeline_mode=pl.Buffered(1)),
            ],
            out_specs=pl.BlockSpec((_TM, Np), lambda i, s: (i, 0)),
        ),
        compiler_params=pltpu.CompilerParams(
            dimension_semantics=("parallel",),
            vmem_limit_bytes=vmem_limit,
        ),
        cost_estimate=pl.CostEstimate(
            flops=2 * Mp * Kp * Np,
            transcendentals=0,
            bytes_accessed=4 * Mp * Kp + 2 * Kp * Np + 4 * Np + 2 * Mp * Np,
        ),
    )(seed, xb, wb, bp)

    # ---- stage 2: out = A @ h (h resident in VMEM, single long-K matmul per stripe) --
    out = pl.pallas_call(
        _aggregate_kernel,
        out_shape=jax.ShapeDtypeStruct((Mp, Np), jnp.float32),
        grid_spec=pltpu.PrefetchScalarGridSpec(
            num_scalar_prefetch=0,
            grid=(Mp // _TM,),
            in_specs=[
                pl.BlockSpec((_TM, Mp), lambda i: (i, 0)),      # A row stripe
                pl.BlockSpec((Mp, Np), lambda i: (0, 0),        # h, DMA'd once, resident
                             pipeline_mode=pl.Buffered(1)),
            ],
            out_specs=pl.BlockSpec((_TM, Np), lambda i: (i, 0)),
        ),
        compiler_params=pltpu.CompilerParams(
            dimension_semantics=("parallel",),
            vmem_limit_bytes=vmem_limit,
        ),
        cost_estimate=pl.CostEstimate(
            flops=2 * Mp * Mp * Np,
            transcendentals=0,
            bytes_accessed=2 * Mp * Mp + 2 * Mp * Np + 4 * Mp * Np,
        ),
    )(ab, h)

    return out[:N, :dim_out]


def _reference(feats, weight, bias, agg, seed):
    """Pure-JAX reference with identical bf16 casts and dropout mask."""
    N, _ = feats.shape
    dim_out = weight.shape[1]
    Np = _round_up(dim_out, _LANE)
    h = jnp.dot(feats.astype(jnp.bfloat16), weight.astype(jnp.bfloat16),
                preferred_element_type=jnp.float32) + bias
    h = jnp.maximum(h, 0.0)
    rows = lax.broadcasted_iota(jnp.int32, (N, dim_out), 0)
    cols = lax.broadcasted_iota(jnp.int32, (N, dim_out), 1)
    keep = _keep_mask(rows, cols, Np, jnp.int32(seed[0]))
    h = jnp.where(keep, h * (1.0 / (1.0 - DROP_P)), 0.0).astype(jnp.bfloat16)
    return jnp.dot(agg.astype(jnp.bfloat16), h, preferred_element_type=jnp.float32)


if __name__ == "__main__":
    # Small, MXU-aligned, lane-dense problem; >= 2 row tiles so the "parallel" row axis
    # can be sharded across both TensorCores on v7x.
    N, DIM_IN, DIM_OUT = 512, 128, 128

    key = jax.random.PRNGKey(0)
    k_x, k_w, k_b = jax.random.split(key, 3)

    feats = jax.random.normal(k_x, (N, DIM_IN), dtype=jnp.float32)
    bound = 1.0 / np.sqrt(DIM_IN)                       # Linear-like uniform init
    weight = jax.random.uniform(k_w, (DIM_IN, DIM_OUT), jnp.float32, -bound, bound)
    bias = jax.random.uniform(k_b, (1, DIM_OUT), jnp.float32, -bound, bound)

    # edge_dict[i] = neighbor indices of node i (variable-length lists in the torch code);
    # densify on the HOST into a row-normalized (mean) aggregation matrix, already padded
    # to the kernel's row-tile grid and stored as bf16, so the wrapper performs no extra
    # pad/cast HBM pass over the O(N^2) array.  Padding rows/cols are zero by construction.
    edge_dict = [[i, (i + 1) % N, (i + 2) % N, (i + 7) % N, (i + 13) % N] for i in range(N)]
    Mp = _round_up(N, _TM)
    agg_np = np.zeros((Mp, Mp), dtype=np.float32)
    for i, nbrs in enumerate(edge_dict):
        agg_np[i, nbrs] = 1.0 / len(nbrs)
    agg = jnp.asarray(agg_np, dtype=jnp.bfloat16)       # pre-padded, pre-cast

    seed = jnp.array([0], dtype=jnp.int32)              # deterministic dropout seed

    out = graph_convolution(feats, weight, bias, agg, seed)
    out = jax.block_until_ready(out)

    ref = _reference(feats, weight, bias, jnp.asarray(agg_np[:N, :N]), seed)
    np.testing.assert_allclose(np.asarray(out), np.asarray(ref), rtol=5e-2, atol=5e-2)
    assert out.shape == (N, DIM_OUT) and out.dtype == jnp.float32
    print("KERNEL_OK")
</pallas_src>

<mosaic_0001>
module attributes {stable_mosaic.version = 11 : i64} {
  func.func @_fc_relu_dropout_kernel(%arg0: i32, %arg1: memref<1xi32, #tpu.memory_space<smem>>, %arg2: memref<256x128xf32, #tpu.memory_space<vmem>>, %arg3: memref<128x128xbf16, #tpu.memory_space<vmem>>, %arg4: memref<1x128xf32, #tpu.memory_space<vmem>>, %arg5: memref<256x128xbf16, #tpu.memory_space<vmem>>) attributes {dimension_semantics = [#tpu.dimension_semantics<parallel>], iteration_bounds = array<i64: 2>, scalar_prefetch = 1 : i64, scratch_operands = 0 : i64, tpu.core_type = #tpu.core_type<tc>, window_params = [{transform_indices = @transform_0, window_bounds = array<i64: 256, 128>}, {pipeline_mode = #tpu.pipeline_mode<synchronous>, transform_indices = @transform_1, window_bounds = array<i64: 128, 128>}, {pipeline_mode = #tpu.pipeline_mode<synchronous>, transform_indices = @transform_2, window_bounds = array<i64: 1, 128>}, {transform_indices = @transform_3, window_bounds = array<i64: 256, 128>}]} {
    %c0 = arith.constant 0 : index
    %c0_0 = arith.constant 0 : index
    %0 = vector.load %arg2[%c0, %c0_0] : memref<256x128xf32, #tpu.memory_space<vmem>>, vector<256x128xf32>
    %1 = arith.truncf %0 : vector<256x128xf32> to vector<256x128xbf16>
    %c0_1 = arith.constant 0 : index
    %c0_2 = arith.constant 0 : index
    %2 = vector.load %arg3[%c0_1, %c0_2] : memref<128x128xbf16, #tpu.memory_space<vmem>>, vector<128x128xbf16>
    %cst = arith.constant dense<0.000000e+00> : vector<256x128xf32>
    %3 = tpu.matmul %1, %2, %cst {dimension_numbers = #tpu.dot_dimension_numbers<[1], [0], [0], [1], [0, 0, 1, 1], [], []>} : vector<256x128xbf16>, vector<128x128xbf16>, vector<256x128xf32> -> vector<256x128xf32>
    %c0_3 = arith.constant 0 : index
    %c0_4 = arith.constant 0 : index
    %4 = vector.load %arg4[%c0_3, %c0_4] : memref<1x128xf32, #tpu.memory_space<vmem>>, vector<1x128xf32>
    %5 = vector.broadcast %4 : vector<1x128xf32> to vector<256x128xf32>
    %6 = arith.addf %3, %5 : vector<256x128xf32>
    %cst_5 = arith.constant 0.000000e+00 : f32
    %7 = vector.broadcast %cst_5 : f32 to vector<256x128xf32>
    %8 = arith.maximumf %6, %7 : vector<256x128xf32>
    %c256_i32 = arith.constant 256 : i32
    %9 = arith.muli %arg0, %c256_i32 : i32
    %10 = tpu.iota {dimensions = array<i32: 0>} : vector<256x128xi32>
    %11 = vector.broadcast %9 : i32 to vector<256x128xi32>
    %12 = arith.addi %10, %11 : vector<256x128xi32>
    %13 = tpu.iota {dimensions = array<i32: 1>} : vector<256x128xi32>
    %c0_6 = arith.constant 0 : index
    %14 = memref.load %arg1[%c0_6] : memref<1xi32, #tpu.memory_space<smem>>
    %c128_i32 = arith.constant 128 : i32
    %15 = vector.broadcast %c128_i32 : i32 to vector<256x128xi32>
    %16 = arith.muli %12, %15 : vector<256x128xi32>
    %17 = arith.addi %16, %13 : vector<256x128xi32>
    %c-1640531527_i32 = arith.constant -1640531527 : i32
    %18 = arith.muli %14, %c-1640531527_i32 : i32
    %19 = vector.broadcast %18 : i32 to vector<256x128xi32>
    %20 = arith.addi %17, %19 : vector<256x128xi32>
    %c16_i32 = arith.constant 16 : i32
    %21 = vector.broadcast %c16_i32 : i32 to vector<256x128xi32>
    %22 = arith.shrui %20, %21 : vector<256x128xi32>
    %23 = arith.xori %20, %22 : vector<256x128xi32>
    %c2146121005_i32 = arith.constant 2146121005 : i32
    %24 = vector.broadcast %c2146121005_i32 : i32 to vector<256x128xi32>
    %25 = arith.muli %23, %24 : vector<256x128xi32>
    %c15_i32 = arith.constant 15 : i32
    %26 = vector.broadcast %c15_i32 : i32 to vector<256x128xi32>
    %27 = arith.shrui %25, %26 : vector<256x128xi32>
    %28 = arith.xori %25, %27 : vector<256x128xi32>
    %c-2073254261_i32 = arith.constant -2073254261 : i32
    %29 = vector.broadcast %c-2073254261_i32 : i32 to vector<256x128xi32>
    %30 = arith.muli %28, %29 : vector<256x128xi32>
    %c16_i32_7 = arith.constant 16 : i32
    %31 = vector.broadcast %c16_i32_7 : i32 to vector<256x128xi32>
    %32 = arith.shrui %30, %31 : vector<256x128xi32>
    %33 = arith.xori %30, %32 : vector<256x128xi32>
    %c1_i32 = arith.constant 1 : i32
    %34 = vector.broadcast %c1_i32 : i32 to vector<256x128xi32>
    %35 = arith.andi %33, %34 : vector<256x128xi32>
    %c1_i32_8 = arith.constant 1 : i32
    %36 = vector.broadcast %c1_i32_8 : i32 to vector<256x128xi32>
    %37 = arith.cmpi eq, %35, %36 : vector<256x128xi32>
    %cst_9 = arith.constant 2.000000e+00 : f32
    %38 = vector.broadcast %cst_9 : f32 to vector<256x128xf32>
    %39 = arith.mulf %8, %38 : vector<256x128xf32>
    %cst_10 = arith.constant 0.000000e+00 : f32
    %40 = vector.broadcast %cst_10 : f32 to vector<256x128xf32>
    %41 = arith.select %37, %39, %40 : vector<256x128xi1>, vector<256x128xf32>
    %42 = arith.truncf %41 : vector<256x128xf32> to vector<256x128xbf16>
    %c0_11 = arith.constant 0 : index
    %c0_12 = arith.constant 0 : index
    %43 = vector.load %arg5[%c0_11, %c0_12] : memref<256x128xbf16, #tpu.memory_space<vmem>>, vector<256x128xbf16>
    tpu.vector_store %arg5[%c0_11, %c0_12], %42 {strides = array<i32>} : memref<256x128xbf16, #tpu.memory_space<vmem>>, vector<256x128xbf16>,
    return
  }
  func.func @transform_0(%arg0: i32, %arg1: memref<1xi32, #tpu.memory_space<smem>>) -> (i32, i32) {
    %c0_i32 = arith.constant 0 : i32
    %c0_i32_0 = arith.constant 0 : i32
    return %arg0, %c0_i32 : i32, i32
  }
  func.func @transform_1(%arg0: i32, %arg1: memref<1xi32, #tpu.memory_space<smem>>) -> (i32, i32) {
    %c0_i32 = arith.constant 0 : i32
    %c0_i32_0 = arith.constant 0 : i32
    %c0_i32_1 = arith.constant 0 : i32
    return %c0_i32, %c0_i32_0 : i32, i32
  }
  func.func @transform_2(%arg0: i32, %arg1: memref<1xi32, #tpu.memory_space<smem>>) -> (i32, i32) {
    %c0_i32 = arith.constant 0 : i32
    %c0_i32_0 = arith.constant 0 : i32
    %c0_i32_1 = arith.constant 0 : i32
    return %c0_i32, %c0_i32_0 : i32, i32
  }
  func.func @transform_3(%arg0: i32, %arg1: memref<1xi32, #tpu.memory_space<smem>>) -> (i32, i32) {
    %c0_i32 = arith.constant 0 : i32
    %c0_i32_0 = arith.constant 0 : i32
    return %arg0, %c0_i32 : i32, i32
  }
}

</mosaic_0001>

<llo_original>
// kernel: tpu_custom_call.1
$region0: #{tpu_custom_call.1}
  #allocation0 [shape = 'u32[]', space=smem, size = 0x4, offset = 0x4, fixed_abs, tag = 'smem constant byte address 0x4 - core index']
  #allocation1 [shape = 'u32[144,128]{1,0:T(1,128)}', space=vmem, size = 0x12000, scoped, tag = 'internal scratch']
  #allocation2 [shape = 's32[1]{0}', space=sflag, size = 0x4, scoped, tag = 'scoped memory for tpu_custom_call.1']
  #allocation3 [shape = 's32[1]{0:T(128)S(6)}', space=smem, size = 0x200, scoped, tag = 'prefetched SMEM operand 0']
  %s0 = inlined_call_operand.<no memory space> [shape: s32[1], index: 0, kind: input, shape index: {}]
  %s1 = inlined_call_operand.hbm [shape: f32[512,128], index: 1, kind: input, shape index: {}]
  %s2 = inlined_call_operand.hbm [shape: bf16[128,128], index: 2, kind: input, shape index: {}]
  %s3 = inlined_call_operand.vmem [shape: f32[1,128], index: 3, kind: input, shape index: {}]
  %s4 = inlined_call_operand.hbm [shape: bf16[512,128], index: 4, kind: output, shape index: {}]
  %s5 = sld [smem:[#allocation0]]
  $region53: #{tpu_custom_call.1} parent=0
    _
  %s7 = ssub.s32 1, %s5
  %s8 = scalar_select 0, %s7, %s5
  %9 = sst [smem:[#allocation3]] %s0
  $region1: #{tpu_custom_call.1} parent=0
    #allocation4 [shape = 'u8[262144]{0}', space=vmem, size = 0x40000, scoped, tag = 'input window, operand 1']
    #allocation5 [shape = 's32[2]{0}', space=sflag, size = 0x8, scoped, tag = 'scoped memory for tpu_custom_call.1']
    #allocation6 [shape = 's32[2]{0}', space=sflag, size = 0x8, scoped, tag = 'scoped memory for tpu_custom_call.1']
    #allocation7 [shape = 'u8[32768]{0}', space=vmem, size = 0x8000, scoped, tag = 'input window, operand 2, single buffered']
    #allocation8 [shape = 's32[1]{0}', space=sflag, size = 0x4, scoped, tag = 'scoped memory for tpu_custom_call.1']
    #allocation9 [shape = 'u8[131072]{0}', space=vmem, size = 0x20000, scoped, tag = 'output window, operand 0']
    %10 = vsyncpa [#allocation5], 0
    %s11 = scalar_lea.sflag [#allocation5], 1
    %12 = vsyncpa %s11, 0
    %13 = vsyncpa [#allocation8], 0
    %14 = vsyncpa [#allocation6], 0
    %s15 = scalar_lea.sflag [#allocation6], 1
    %16 = vsyncpa %s15, 0
    loop: start=0, step=1, limit=4
    $region2: #{tpu_custom_call.1} parent=1 // loop_pre_header
      _
    $region3: #{tpu_custom_call.1} parent=1 // loop_header
      %s18 = sphi 0, %s22
      %p19 = scmp.ge.s32.totalorder %s18, 4
      %s28 = sphi 0, %s30
      %s31 = sphi 0, %s28
      %s32 = sphi 0, %s31
      %s48 = sphi 0, %s32
      %s52 = sphi 0, %s52
      %s54 = sphi 0, %s52
      %s55 = sphi 0, %s54
      %s69 = sphi 0, %s55
      %s73 = sphi 0, %s73
      %s75 = sphi 0, %s73
      %s76 = sphi 0, %s75
      %s90 = sphi 0, %s76
      %s96 = sphi 0, %s98
      %s99 = sphi 0, %s96
      %s100 = sphi 0, %s99
      %s116 = sphi 0, %s100
    $region4: #{tpu_custom_call.1} parent=1 // loop_header_branch
      %21 = sbr.rel (%p19) target = $region8
    $region5: #{tpu_custom_call.1} parent=1 // loop_body
      %s23 = ssub.s32 %s18, 1
      %s24 = ssub.s32 %s18, 2
      %s25 = sadd.s32 %s18, 1
      %s26 = ssub.s32 %s18, %s25
      %p27 = scmp.eq.s32.totalorder %s26, 0
      %s29 = sadd.s32 %s28, 1
      %s30 = scalar_select %p27, %s28, %s29
      %p33 = pneg %p27
      %p34 = scmp.eq.s32.totalorder %s18, 1
      %p35 = por %p33, %p34
      %p36 = scmp.ne.s32.totalorder %s28, %s31
      %p37 = scmp.eq.s32.totalorder %s18, 0
      %p38 = por %p36, %p37
      %p39 = scmp.ne.s32.totalorder %s28, %s31
      %p40 = scmp.eq.s32.totalorder %s23, 1
      %p41 = por %p39, %p40
      %p42 = scmp.ne.s32.totalorder %s31, %s32
      %p43 = scmp.eq.s32.totalorder %s23, 0
      %p44 = por %p42, %p43
      %p45 = scmp.ne.s32.totalorder %s31, %s32
      %p46 = scmp.eq.s32.totalorder %s24, 1
      %p47 = por %p45, %p46
      %p49 = scmp.ne.s32.totalorder %s32, %s48
      %p50 = scmp.eq.s32.totalorder %s24, 0
      %p51 = por %p49, %p50
      %s53 = sadd.s32 %s52, 1
      %p56 = scmp.eq.s32.totalorder %s18, 1
      %p57 = scmp.ne.s32.totalorder %s52, %s54
      %p58 = scmp.eq.s32.totalorder %s18, 0
      %p59 = por %p57, %p58
      %p60 = scmp.ne.s32.totalorder %s52, %s54
      %p61 = scmp.eq.s32.totalorder %s23, 1
      %p62 = por %p60, %p61
      %p63 = scmp.ne.s32.totalorder %s54, %s55
      %p64 = scmp.eq.s32.totalorder %s23, 0
      %p65 = por %p63, %p64
      %p66 = scmp.ne.s32.totalorder %s54, %s55
      %p67 = scmp.eq.s32.totalorder %s24, 1
      %p68 = por %p66, %p67
      %p70 = scmp.ne.s32.totalorder %s55, %s69
      %p71 = scmp.eq.s32.totalorder %s24, 0
      %p72 = por %p70, %p71
      %s74 = sadd.s32 %s73, 1
      %p77 = scmp.eq.s32.totalorder %s18, 1
      %p78 = scmp.ne.s32.totalorder %s73, %s75
      %p79 = scmp.eq.s32.totalorder %s18, 0
      %p80 = por %p78, %p79
      %p81 = scmp.ne.s32.totalorder %s73, %s75
      %p82 = scmp.eq.s32.totalorder %s23, 1
      %p83 = por %p81, %p82
      %p84 = scmp.ne.s32.totalorder %s75, %s76
      %p85 = scmp.eq.s32.totalorder %s23, 0
      %p86 = por %p84, %p85
      %p87 = scmp.ne.s32.totalorder %s75, %s76
      %p88 = scmp.eq.s32.totalorder %s24, 1
      %p89 = por %p87, %p88
      %p91 = scmp.ne.s32.totalorder %s76, %s90
      %p92 = scmp.eq.s32.totalorder %s24, 0
      %p93 = por %p91, %p92
      %s94 = ssub.s32 %s18, %s25
      %p95 = scmp.eq.s32.totalorder %s94, 0
      %s97 = sadd.s32 %s96, 1
      %s98 = scalar_select %p95, %s96, %s97
      %p101 = pneg %p95
      %p102 = scmp.eq.s32.totalorder %s18, 1
      %p103 = por %p101, %p102
      %p104 = scmp.ne.s32.totalorder %s96, %s99
      %p105 = scmp.eq.s32.totalorder %s18, 0
      %p106 = por %p104, %p105
      %p107 = scmp.ne.s32.totalorder %s96, %s99
      %p108 = scmp.eq.s32.totalorder %s23, 1
      %p109 = por %p107, %p108
      %p110 = scmp.ne.s32.totalorder %s99, %s100
      %p111 = scmp.eq.s32.totalorder %s23, 0
      %p112 = por %p110, %p111
      %p113 = scmp.ne.s32.totalorder %s99, %s100
      %p114 = scmp.eq.s32.totalorder %s24, 1
      %p115 = por %p113, %p114
      %p117 = scmp.ne.s32.totalorder %s100, %s116
      %p118 = scmp.eq.s32.totalorder %s24, 0
      %p119 = por %p117, %p118
      %p120 = scmp.le.s32.totalorder 1, %s18
      %p121 = scmp.lt.s32.totalorder %s18, 3
      %p122 = pnand %p120, %p121
      %p123 = pneg %p122
      // Predicated region
      $region9: #{tpu_custom_call.1} parent=5 // pred_check
        _
      $region10: #{tpu_custom_call.1} parent=5 // pred_check_branch
        %125 = sbr.rel (%p122) target = $region12
      $region11: #{tpu_custom_call.1} parent=5 // pred_region
        %s126 = ssub.s32 %s18, 1
        // Predicated region
        $region13: #{tpu_custom_call.1} parent=11 // pred_check
          %p127 = pneg %p65
        $region14: #{tpu_custom_call.1} parent=11 // pred_check_branch
          %129 = sbr.rel (%p127) target = $region16
        $region15: #{tpu_custom_call.1} parent=11 // pred_region
          %s131 = ssub.s32 1024, 1024
          %132 = vsyncadd [#allocation8], %s131
          %s133 = sshll.u32 [#allocation7], 4
          %s134 = int_to_ptr.vmem [resolvable:$true] %s133
          %139 = dma.hbm_to_vmem [thread:$0]  %s2, 1024, %s134, [#allocation8], 64, 64, 4
        $region16: #{tpu_custom_call.1} parent=11 // pred_fallthru
          _
        // Predicated region
        $region17: #{tpu_custom_call.1} parent=11 // pred_check
          %p140 = pneg %p86
        $region18: #{tpu_custom_call.1} parent=11 // pred_check_branch
          %142 = sbr.rel (%p140) target = $region20
        $region19: #{tpu_custom_call.1} parent=11 // pred_region
          _
        $region20: #{tpu_custom_call.1} parent=11 // pred_fallthru
          _
      $region12: #{tpu_custom_call.1} parent=5 // pred_fallthru
        _
      %p143 = scmp.lt.s32.totalorder %s18, 2
      // Predicated region
      $region21: #{tpu_custom_call.1} parent=5 // pred_check
        %p144 = pneg %p143
      $region22: #{tpu_custom_call.1} parent=5 // pred_check_branch
        %146 = sbr.rel (%p144) target = $region24
      $region23: #{tpu_custom_call.1} parent=5 // pred_region
        // Predicated region
        $region25: #{tpu_custom_call.1} parent=23 // pred_check
          %p147 = pneg %p38
        $region26: #{tpu_custom_call.1} parent=23 // pred_check_branch
          %149 = sbr.rel (%p147) target = $region28
        $region27: #{tpu_custom_call.1} parent=23 // pred_region
          %s150 = sand.u32 %s28, 1
          %s151 = scalar_lea.sflag [#allocation5], %s150
          %s152 = sand.u32 %s28, 1
          %s153 = smul.addr %s152, 256
          %s154 = scalar_lea.vmem [#allocation4], %s153
          %s155 = smul.u32 32, %s18
          %s157 = ssub.s32 4096, 4096
          %158 = vsyncadd %s151, %s157
          %s159 = smul.addr %s155, 128
          %s160 = scalar_lea.hbm %s1, %s159
          %s161 = sshll.u32 %s154, 4
          %s162 = int_to_ptr.vmem [resolvable:$true] %s161
          %167 = dma.hbm_to_vmem [thread:$0]  %s160, 4096, %s162, %s151, 128, 128, 8
        $region28: #{tpu_custom_call.1} parent=23 // pred_fallthru
          _
      $region24: #{tpu_custom_call.1} parent=5 // pred_fallthru
        _
      %p168 = scmp.le.s32.totalorder 1, %s18
      %p169 = scmp.lt.s32.totalorder %s18, 3
      %p170 = pnand %p168, %p169
      %p171 = pneg %p170
      // Predicated region
      $region29: #{tpu_custom_call.1} parent=5 // pred_check
        _
      $region30: #{tpu_custom_call.1} parent=5 // pred_check_branch
        %173 = sbr.rel (%p170) target = $region32
      $region31: #{tpu_custom_call.1} parent=5 // pred_region
        %s174 = ssub.s32 %s18, 1
        %s175 = sand.u32 %s31, 1
        %s176 = scalar_lea.sflag [#allocation5], %s175
        %s177 = sand.u32 %s31, 1
        %s178 = smul.addr %s177, 256
        %s179 = scalar_lea.vmem [#allocation4], %s178
        // Predicated region
        $region33: #{tpu_custom_call.1} parent=31 // pred_check
          %p180 = pneg %p44
        $region34: #{tpu_custom_call.1} parent=31 // pred_check_branch
          %182 = sbr.rel (%p180) target = $region36
        $region35: #{tpu_custom_call.1} parent=31 // pred_region
          %183 = dma.done %s176, 4096
        $region36: #{tpu_custom_call.1} parent=31 // pred_fallthru
          _
        // Predicated region
        $region37: #{tpu_custom_call.1} parent=31 // pred_check
          %p184 = pneg %p65
        $region38: #{tpu_custom_call.1} parent=31 // pred_check_branch
          %186 = sbr.rel (%p184) target = $region40
        $region39: #{tpu_custom_call.1} parent=31 // pred_region
          %187 = dma.done [#allocation8], 1024
        $region40: #{tpu_custom_call.1} parent=31 // pred_fallthru
          _
        %s188 = sand.u32 %s31, 1
        %s189 = scalar_lea.sflag [#allocation5], %s188
        %s190 = sand.u32 %s31, 1
        %s191 = smul.addr %s190, 256
        %s192 = scalar_lea.vmem [#allocation4], %s191
        %p193 = pneg %p44
        %p194 = pneg %p41
        %p195 = pneg %p65
        %p196 = pneg %p62
        %p197 = pneg %p86
        %p198 = pneg %p83
        %p199 = pneg %p112
        %p200 = pneg %p109
        %s201 = sand.u32 %s99, 1
        %s202 = scalar_lea.sflag [#allocation6], %s201
        %s203 = sand.u32 %s99, 1
        %s204 = smul.addr %s203, 128
        %s205 = scalar_lea.vmem [#allocation9], %s204
        %s206 = smul.u32 32, %s23
        %s207 = smul.u32 32, %s23
        %v209 = vld [vmem:[%s179] sm:$0xff]
        %v210 = vld [vmem:[%s179 + $0x8] sm:$0xff]
        %v211 = vld [vmem:[%s179 + $0x10] sm:$0xff]
        %v212 = vld [vmem:[%s179 + $0x18] sm:$0xff]
        %v213 = vld [vmem:[%s179 + $0x20] sm:$0xff]
        %v214 = vld [vmem:[%s179 + $0x28] sm:$0xff]
        %v215 = vld [vmem:[%s179 + $0x30] sm:$0xff]
        %v216 = vld [vmem:[%s179 + $0x38] sm:$0xff]
        %v217 = vld [vmem:[%s179 + $0x40] sm:$0xff]
        %v218 = vld [vmem:[%s179 + $0x48] sm:$0xff]
        %v219 = vld [vmem:[%s179 + $0x50] sm:$0xff]
        %v220 = vld [vmem:[%s179 + $0x58] sm:$0xff]
        %v221 = vld [vmem:[%s179 + $0x60] sm:$0xff]
        %v222 = vld [vmem:[%s179 + $0x68] sm:$0xff]
        %v223 = vld [vmem:[%s179 + $0x70] sm:$0xff]
        %v224 = vld [vmem:[%s179 + $0x78] sm:$0xff]
        %v225 = vld [vmem:[%s179 + $0x80] sm:$0xff]
        %v226 = vld [vmem:[%s179 + $0x88] sm:$0xff]
        %v227 = vld [vmem:[%s179 + $0x90] sm:$0xff]
        %v228 = vld [vmem:[%s179 + $0x98] sm:$0xff]
        %v229 = vld [vmem:[%s179 + $0xa0] sm:$0xff]
        %v230 = vld [vmem:[%s179 + $0xa8] sm:$0xff]
        %v231 = vld [vmem:[%s179 + $0xb0] sm:$0xff]
        %v232 = vld [vmem:[%s179 + $0xb8] sm:$0xff]
        %v233 = vld [vmem:[%s179 + $0xc0] sm:$0xff]
        %v234 = vld [vmem:[%s179 + $0xc8] sm:$0xff]
        %v235 = vld [vmem:[%s179 + $0xd0] sm:$0xff]
        %v236 = vld [vmem:[%s179 + $0xd8] sm:$0xff]
        %v237 = vld [vmem:[%s179 + $0xe0] sm:$0xff]
        %v238 = vld [vmem:[%s179 + $0xe8] sm:$0xff]
        %v239 = vld [vmem:[%s179 + $0xf0] sm:$0xff]
        %v240 = vld [vmem:[%s179 + $0xf8] sm:$0xff]
        %v241 = vpack.c.bf16 %v210, %v209
        %v242 = vpack.c.bf16 %v212, %v211
        %v243 = vpack.c.bf16 %v214, %v213
        %v244 = vpack.c.bf16 %v216, %v215
        %v245 = vpack.c.bf16 %v218, %v217
        %v246 = vpack.c.bf16 %v220, %v219
        %v247 = vpack.c.bf16 %v222, %v221
        %v248 = vpack.c.bf16 %v224, %v223
        %v249 = vpack.c.bf16 %v226, %v225
        %v250 = vpack.c.bf16 %v228, %v227
        %v251 = vpack.c.bf16 %v230, %v229
        %v252 = vpack.c.bf16 %v232, %v231
        %v253 = vpack.c.bf16 %v234, %v233
        %v254 = vpack.c.bf16 %v236, %v235
        %v255 = vpack.c.bf16 %v238, %v237
        %v256 = vpack.c.bf16 %v240, %v239
        %v257 = vld [vmem:[#allocation7] sm:$0xf]
        %v258 = vld [vmem:[#allocation7 + $0x4] sm:$0xf]
        %v259 = vld [vmem:[#allocation7 + $0x8] sm:$0xf]
        %v260 = vld [vmem:[#allocation7 + $0xc] sm:$0xf]
        %v261 = vld [vmem:[#allocation7 + $0x10] sm:$0xf]
        %v262 = vld [vmem:[#allocation7 + $0x14] sm:$0xf]
        %v263 = vld [vmem:[#allocation7 + $0x18] sm:$0xf]
        %v264 = vld [vmem:[#allocation7 + $0x1c] sm:$0xf]
        %v265 = vld [vmem:[#allocation7 + $0x20] sm:$0xf]
        %v266 = vld [vmem:[#allocation7 + $0x24] sm:$0xf]
        %v267 = vld [vmem:[#allocation7 + $0x28] sm:$0xf]
        %v268 = vld [vmem:[#allocation7 + $0x2c] sm:$0xf]
        %v269 = vld [vmem:[#allocation7 + $0x30] sm:$0xf]
        %v270 = vld [vmem:[#allocation7 + $0x34] sm:$0xf]
        %v271 = vld [vmem:[#allocation7 + $0x38] sm:$0xf]
        %v272 = vld [vmem:[#allocation7 + $0x3c] sm:$0xf]
        %v273 = vld [vmem:[%s3] sm:$0x1]
        %v275 = vlaneseq
        %v276 = vshrl.u32 %v275, 7
        %v277 = vsub.s32 0, %v276
        %v278 = vrot.slane %v273, %v277
        %v296 = vunpack.c.l.b16 %v257
        %v297 = vunpack.c.l.b16 %v258
        %v298 = vunpack.c.l.b16 %v259
        %v299 = vunpack.c.l.b16 %v260
        %v300 = vunpack.c.l.b16 %v261
        %v301 = vunpack.c.l.b16 %v262
        %v302 = vunpack.c.l.b16 %v263
        %v303 = vunpack.c.l.b16 %v264
        %v304 = vunpack.c.l.b16 %v265
        %v305 = vunpack.c.l.b16 %v266
        %v306 = vunpack.c.l.b16 %v267
        %v307 = vunpack.c.l.b16 %v268
        %v308 = vunpack.c.l.b16 %v269
        %v309 = vunpack.c.l.b16 %v270
        %v310 = vunpack.c.l.b16 %v271
        %v311 = vunpack.c.l.b16 %v272
        %v312 = vpack.c.b16 %v297, %v296
        %v313 = vpack.c.b16 %v299, %v298
        %v314 = vpack.c.b16 %v301, %v300
        %v315 = vpack.c.b16 %v303, %v302
        %v316 = vpack.c.b16 %v305, %v304
        %v317 = vpack.c.b16 %v307, %v306
        %v318 = vpack.c.b16 %v309, %v308
        %v319 = vpack.c.b16 %v311, %v310
        %328 = vmatprep.subr.bf16.mxu0 0
        %329 = vmatpush1.bf16.msra.mxu0 %v312
        %330 = vmatprep.subr.bf16.mxu0 0
        %331 = vmatpush1.bf16.msra.mxu0 %v313
        %332 = vmatprep.subr.bf16.mxu0 0
        %333 = vmatpush1.bf16.msra.mxu0 %v314
        %334 = vmatprep.subr.bf16.mxu0 0
        %335 = vmatpush1.bf16.msra.mxu0 %v315
        %336 = vmatprep.subr.bf16.mxu0 0
        %337 = vmatpush1.bf16.msra.mxu0 %v316
        %338 = vmatprep.subr.bf16.mxu0 0
        %339 = vmatpush1.bf16.msra.mxu0 %v317
        %340 = vmatprep.subr.bf16.mxu0 0
        %341 = vmatpush1.bf16.msra.mxu0 %v318
        %342 = vmatprep.subr.bf16.mxu0 0
        %343 = vmatpush1.bf16.msra.mxu0 %v319
        %344 = vmatprep.subr.bf16.mxu0 0
        %345 = vmatpush1.bf16.msra.mxu0 0
        %346 = vmatprep.subr.bf16.mxu0 0
        %347 = vmatpush1.bf16.msra.mxu0 0
        %348 = vmatprep.subr.bf16.mxu0 0
        %349 = vmatpush1.bf16.msra.mxu0 0
        %350 = vmatprep.subr.bf16.mxu0 0
        %351 = vmatpush1.bf16.msra.mxu0 0
        %352 = vmatprep.subr.bf16.mxu0 0
        %353 = vmatpush1.bf16.msra.mxu0 0
        %354 = vmatprep.subr.bf16.mxu0 0
        %355 = vmatpush1.bf16.msra.mxu0 0
        %356 = vmatprep.subr.bf16.mxu0 0
        %357 = vmatpush1.bf16.msra.mxu0 0
        %358 = vmatprep.subr.bf16.mxu0 0
        %359 = vmatpush1.bf16.msra.mxu0 0
        %360 = vmatprep.mubr.bf16.mxu0 0
        %361 = vmatmul.mubr.bf16.gmra.mrb[0].mxu0 %v241
        %v362 = vpop.f32.mrb[0].mxu0
        %v363 = vadd.f32 %v278, %v362
        %v364 = vpop.f32.mrb[0].mxu0
        %v365 = vpop.f32.mrb[0].mxu0
        %v366 = vadd.f32 %v278, %v365
        %v367 = vpop.f32.mrb[0].mxu0
        %368 = vmatprep.mubr.bf16.mxu0 0
        %369 = vmatmul.mubr.bf16.gmra.mrb[0].mxu0 %v242
        %v370 = vpop.f32.mrb[0].mxu0
        %v371 = vadd.f32 %v278, %v370
        %v372 = vpop.f32.mrb[0].mxu0
        %v373 = vpop.f32.mrb[0].mxu0
        %v374 = vadd.f32 %v278, %v373
        %v375 = vpop.f32.mrb[0].mxu0
        %376 = vmatprep.mubr.bf16.mxu0 0
        %377 = vmatmul.mubr.bf16.gmra.mrb[0].mxu0 %v243
        %v378 = vpop.f32.mrb[0].mxu0
        %v379 = vadd.f32 %v278, %v378
        %v380 = vpop.f32.mrb[0].mxu0
        %v381 = vpop.f32.mrb[0].mxu0
        %v382 = vadd.f32 %v278, %v381
        %v383 = vpop.f32.mrb[0].mxu0
        %384 = vmatprep.mubr.bf16.mxu0 0
        %385 = vmatmul.mubr.bf16.gmra.mrb[0].mxu0 %v244
        %v386 = vpop.f32.mrb[0].mxu0
        %v387 = vadd.f32 %v278, %v386
        %v388 = vpop.f32.mrb[0].mxu0
        %v389 = vpop.f32.mrb[0].mxu0
        %v390 = vadd.f32 %v278, %v389
        %v391 = vpop.f32.mrb[0].mxu0
        %392 = vmatprep.mubr.bf16.mxu0 0
        %393 = vmatmul.mubr.bf16.gmra.mrb[0].mxu0 %v245
        %v394 = vpop.f32.mrb[0].mxu0
        %v395 = vadd.f32 %v278, %v394
        %v396 = vpop.f32.mrb[0].mxu0
        %v397 = vpop.f32.mrb[0].mxu0
        %v398 = vadd.f32 %v278, %v397
        %v399 = vpop.f32.mrb[0].mxu0
        %400 = vmatprep.mubr.bf16.mxu0 0
        %401 = vmatmul.mubr.bf16.gmra.mrb[0].mxu0 %v246
        %v402 = vpop.f32.mrb[0].mxu0
        %v403 = vadd.f32 %v278, %v402
        %v404 = vpop.f32.mrb[0].mxu0
        %v405 = vpop.f32.mrb[0].mxu0
        %v406 = vadd.f32 %v278, %v405
        %v407 = vpop.f32.mrb[0].mxu0
        %408 = vmatprep.mubr.bf16.mxu0 0
        %409 = vmatmul.mubr.bf16.gmra.mrb[0].mxu0 %v247
        %v410 = vpop.f32.mrb[0].mxu0
        %v411 = vadd.f32 %v278, %v410
        %v412 = vpop.f32.mrb[0].mxu0
        %v413 = vpop.f32.mrb[0].mxu0
        %v414 = vadd.f32 %v278, %v413
        %v415 = vpop.f32.mrb[0].mxu0
        %416 = vmatprep.mubr.bf16.mxu0 0
        %417 = vmatmul.mubr.bf16.gmra.mrb[0].mxu0 %v248
        %v418 = vpop.f32.mrb[0].mxu0
        %v419 = vadd.f32 %v278, %v418
        %v420 = vpop.f32.mrb[0].mxu0
        %v421 = vpop.f32.mrb[0].mxu0
        %v422 = vadd.f32 %v278, %v421
        %v423 = vpop.f32.mrb[0].mxu0
        %424 = vmatprep.mubr.bf16.mxu0 0
        %425 = vmatmul.mubr.bf16.gmra.mrb[0].mxu0 %v249
        %v426 = vpop.f32.mrb[0].mxu0
        %v427 = vadd.f32 %v278, %v426
        %v428 = vpop.f32.mrb[0].mxu0
        %v429 = vpop.f32.mrb[0].mxu0
        %v430 = vadd.f32 %v278, %v429
        %v431 = vpop.f32.mrb[0].mxu0
        %432 = vmatprep.mubr.bf16.mxu0 0
        %433 = vmatmul.mubr.bf16.gmra.mrb[0].mxu0 %v250
        %v434 = vpop.f32.mrb[0].mxu0
        %v435 = vadd.f32 %v278, %v434
        %v436 = vpop.f32.mrb[0].mxu0
        %v437 = vpop.f32.mrb[0].mxu0
        %v438 = vadd.f32 %v278, %v437
        %v439 = vpop.f32.mrb[0].mxu0
        %440 = vmatprep.mubr.bf16.mxu0 0
        %441 = vmatmul.mubr.bf16.gmra.mrb[0].mxu0 %v251
        %v442 = vpop.f32.mrb[0].mxu0
        %v443 = vadd.f32 %v278, %v442
        %v444 = vpop.f32.mrb[0].mxu0
        %v445 = vpop.f32.mrb[0].mxu0
        %v446 = vadd.f32 %v278, %v445
        %v447 = vpop.f32.mrb[0].mxu0
        %448 = vmatprep.mubr.bf16.mxu0 0
        %449 = vmatmul.mubr.bf16.gmra.mrb[0].mxu0 %v252
        %v450 = vpop.f32.mrb[0].mxu0
        %v451 = vadd.f32 %v278, %v450
        %v452 = vpop.f32.mrb[0].mxu0
        %v453 = vpop.f32.mrb[0].mxu0
        %v454 = vadd.f32 %v278, %v453
        %v455 = vpop.f32.mrb[0].mxu0
        %456 = vmatprep.mubr.bf16.mxu0 0
        %457 = vmatmul.mubr.bf16.gmra.mrb[0].mxu0 %v253
        %v458 = vpop.f32.mrb[0].mxu0
        %v459 = vadd.f32 %v278, %v458
        %v460 = vpop.f32.mrb[0].mxu0
        %v461 = vpop.f32.mrb[0].mxu0
        %v462 = vadd.f32 %v278, %v461
        %v463 = vpop.f32.mrb[0].mxu0
        %464 = vmatprep.mubr.bf16.mxu0 0
        %465 = vmatmul.mubr.bf16.gmra.mrb[0].mxu0 %v254
        %v466 = vpop.f32.mrb[0].mxu0
        %v467 = vadd.f32 %v278, %v466
        %v468 = vpop.f32.mrb[0].mxu0
        %v469 = vpop.f32.mrb[0].mxu0
        %v470 = vadd.f32 %v278, %v469
        %v471 = vpop.f32.mrb[0].mxu0
        %472 = vmatprep.mubr.bf16.mxu0 0
        %473 = vmatmul.mubr.bf16.gmra.mrb[0].mxu0 %v255
        %v474 = vpop.f32.mrb[0].mxu0
        %v475 = vadd.f32 %v278, %v474
        %v476 = vpop.f32.mrb[0].mxu0
        %v477 = vpop.f32.mrb[0].mxu0
        %v478 = vadd.f32 %v278, %v477
        %v479 = vpop.f32.mrb[0].mxu0
        %480 = vmatprep.mubr.bf16.mxu0 0
        %481 = vmatmul.mubr.bf16.gmra.mrb[0].mxu0 %v256
        %v482 = vpop.f32.mrb[0].mxu0
        %v483 = vadd.f32 %v278, %v482
        %v484 = vpop.f32.mrb[0].mxu0
        %v485 = vpop.f32.mrb[0].mxu0
        %v486 = vadd.f32 %v278, %v485
        %v487 = vpop.f32.mrb[0].mxu0
        %488 = vdwg.mxu0
        %v489 = vmax.f32 %v363, 0.0
        %v490 = vmax.f32 %v366, 0.0
        %v491 = vmax.f32 %v371, 0.0
        %v492 = vmax.f32 %v374, 0.0
        %v493 = vmax.f32 %v379, 0.0
        %v494 = vmax.f32 %v382, 0.0
        %v495 = vmax.f32 %v387, 0.0
        %v496 = vmax.f32 %v390, 0.0
        %v497 = vmax.f32 %v395, 0.0
        %v498 = vmax.f32 %v398, 0.0
        %v499 = vmax.f32 %v403, 0.0
        %v500 = vmax.f32 %v406, 0.0
        %v501 = vmax.f32 %v411, 0.0
        %v502 = vmax.f32 %v414, 0.0
        %v503 = vmax.f32 %v419, 0.0
        %v504 = vmax.f32 %v422, 0.0
        %v505 = vmax.f32 %v427, 0.0
        %v506 = vmax.f32 %v430, 0.0
        %v507 = vmax.f32 %v435, 0.0
        %v508 = vmax.f32 %v438, 0.0
        %v509 = vmax.f32 %v443, 0.0
        %v510 = vmax.f32 %v446, 0.0
        %v511 = vmax.f32 %v451, 0.0
        %v512 = vmax.f32 %v454, 0.0
        %v513 = vmax.f32 %v459, 0.0
        %v514 = vmax.f32 %v462, 0.0
        %v515 = vmax.f32 %v467, 0.0
        %v516 = vmax.f32 %v470, 0.0
        %v517 = vmax.f32 %v475, 0.0
        %v518 = vmax.f32 %v478, 0.0
        %v519 = vmax.f32 %v483, 0.0
        %v520 = vmax.f32 %v486, 0.0
        %s521 = smul.u32 %s23, 256
        %v522 = vlaneseq
        %v523 = vshrl.u32 %v522, 7
        %v524 = vadd.s32 %v523, 8
        %v525 = vadd.s32 %v523, 16
        %v526 = vadd.s32 %v523, 24
        %v527 = vadd.s32 %v523, 32
        %v528 = vadd.s32 %v523, 40
        %v529 = vadd.s32 %v523, 48
        %v530 = vadd.s32 %v523, 56
        %v531 = vadd.s32 %v523, 64
        %v532 = vadd.s32 %v523, 72
        %v533 = vadd.s32 %v523, 80
        %v534 = vadd.s32 %v523, 88
        %v535 = vadd.s32 %v523, 96
        %v536 = vadd.s32 %v523, 104
        %v537 = vadd.s32 %v523, 112
        %v538 = vadd.s32 %v523, 120
        %v539 = vadd.s32 %v523, 128
        %v540 = vadd.s32 %v523, 136
        %v541 = vadd.s32 %v523, 144
        %v542 = vadd.s32 %v523, 152
        %v543 = vadd.s32 %v523, 160
        %v544 = vadd.s32 %v523, 168
        %v545 = vadd.s32 %v523, 176
        %v546 = vadd.s32 %v523, 184
        %v547 = vadd.s32 %v523, 192
        %v548 = vadd.s32 %v523, 200
        %v549 = vadd.s32 %v523, 208
        %v550 = vadd.s32 %v523, 216
        %v551 = vadd.s32 %v523, 224
        %v552 = vadd.s32 %v523, 232
        %v553 = vadd.s32 %v523, 240
        %v554 = vadd.s32 %v523, 248
        %v555 = vstv %s521
        %v556 = vadd.s32 %v523, %v555
        %v557 = vadd.s32 %v524, %v555
        %v558 = vadd.s32 %v525, %v555
        %v559 = vadd.s32 %v526, %v555
        %v560 = vadd.s32 %v527, %v555
        %v561 = vadd.s32 %v528, %v555
        %v562 = vadd.s32 %v529, %v555
        %v563 = vadd.s32 %v530, %v555
        %v564 = vadd.s32 %v531, %v555
        %v565 = vadd.s32 %v532, %v555
        %v566 = vadd.s32 %v533, %v555
        %v567 = vadd.s32 %v534, %v555
        %v568 = vadd.s32 %v535, %v555
        %v569 = vadd.s32 %v536, %v555
        %v570 = vadd.s32 %v537, %v555
        %v571 = vadd.s32 %v538, %v555
        %v572 = vadd.s32 %v539, %v555
        %v573 = vadd.s32 %v540, %v555
        %v574 = vadd.s32 %v541, %v555
        %v575 = vadd.s32 %v542, %v555
        %v576 = vadd.s32 %v543, %v555
        %v577 = vadd.s32 %v544, %v555
        %v578 = vadd.s32 %v545, %v555
        %v579 = vadd.s32 %v546, %v555
        %v580 = vadd.s32 %v547, %v555
        %v581 = vadd.s32 %v548, %v555
        %v582 = vadd.s32 %v549, %v555
        %v583 = vadd.s32 %v550, %v555
        %v584 = vadd.s32 %v551, %v555
        %v585 = vadd.s32 %v552, %v555
        %v586 = vadd.s32 %v553, %v555
        %v587 = vadd.s32 %v554, %v555
        %v588 = vlaneseq
        %v589 = vand.u32 %v588, 127
        %s590 = sld [smem:[#allocation3]]
        %v591 = vmul.u32 %v556, 128
        %v592 = vmul.u32 %v557, 128
        %v593 = vmul.u32 %v558, 128
        %v594 = vmul.u32 %v559, 128
        %v595 = vmul.u32 %v560, 128
        %v596 = vmul.u32 %v561, 128
        %v597 = vmul.u32 %v562, 128
        %v598 = vmul.u32 %v563, 128
        %v599 = vmul.u32 %v564, 128
        %v600 = vmul.u32 %v565, 128
        %v601 = vmul.u32 %v566, 128
        %v602 = vmul.u32 %v567, 128
        %v603 = vmul.u32 %v568, 128
        %v604 = vmul.u32 %v569, 128
        %v605 = vmul.u32 %v570, 128
        %v606 = vmul.u32 %v571, 128
        %v607 = vmul.u32 %v572, 128
        %v608 = vmul.u32 %v573, 128
        %v609 = vmul.u32 %v574, 128
        %v610 = vmul.u32 %v575, 128
        %v611 = vmul.u32 %v576, 128
        %v612 = vmul.u32 %v577, 128
        %v613 = vmul.u32 %v578, 128
        %v614 = vmul.u32 %v579, 128
        %v615 = vmul.u32 %v580, 128
        %v616 = vmul.u32 %v581, 128
        %v617 = vmul.u32 %v582, 128
        %v618 = vmul.u32 %v583, 128
        %v619 = vmul.u32 %v584, 128
        %v620 = vmul.u32 %v585, 128
        %v621 = vmul.u32 %v586, 128
        %v622 = vmul.u32 %v587, 128
        %v623 = vadd.s32 %v591, %v589
        %v624 = vadd.s32 %v592, %v589
        %v625 = vadd.s32 %v593, %v589
        %v626 = vadd.s32 %v594, %v589
        %v627 = vadd.s32 %v595, %v589
        %v628 = vadd.s32 %v596, %v589
        %v629 = vadd.s32 %v597, %v589
        %v630 = vadd.s32 %v598, %v589
        %v631 = vadd.s32 %v599, %v589
        %v632 = vadd.s32 %v600, %v589
        %v633 = vadd.s32 %v601, %v589
        %v634 = vadd.s32 %v602, %v589
        %v635 = vadd.s32 %v603, %v589
        %v636 = vadd.s32 %v604, %v589
        %v637 = vadd.s32 %v605, %v589
        %v638 = vadd.s32 %v606, %v589
        %v639 = vadd.s32 %v607, %v589
        %v640 = vadd.s32 %v608, %v589
        %v641 = vadd.s32 %v609, %v589
        %v642 = vadd.s32 %v610, %v589
        %v643 = vadd.s32 %v611, %v589
        %v644 = vadd.s32 %v612, %v589
        %v645 = vadd.s32 %v613, %v589
        %v646 = vadd.s32 %v614, %v589
        %v647 = vadd.s32 %v615, %v589
        %v648 = vadd.s32 %v616, %v589
        %v649 = vadd.s32 %v617, %v589
        %v650 = vadd.s32 %v618, %v589
        %v651 = vadd.s32 %v619, %v589
        %v652 = vadd.s32 %v620, %v589
        %v653 = vadd.s32 %v621, %v589
        %v654 = vadd.s32 %v622, %v589
        %s655 = smul.u32 %s590, 2654435769
        %v656 = vstv %s655
        %v657 = vadd.s32 %v623, %v656
        %v658 = vadd.s32 %v624, %v656
        %v659 = vadd.s32 %v625, %v656
        %v660 = vadd.s32 %v626, %v656
        %v661 = vadd.s32 %v627, %v656
        %v662 = vadd.s32 %v628, %v656
        %v663 = vadd.s32 %v629, %v656
        %v664 = vadd.s32 %v630, %v656
        %v665 = vadd.s32 %v631, %v656
        %v666 = vadd.s32 %v632, %v656
        %v667 = vadd.s32 %v633, %v656
        %v668 = vadd.s32 %v634, %v656
        %v669 = vadd.s32 %v635, %v656
        %v670 = vadd.s32 %v636, %v656
        %v671 = vadd.s32 %v637, %v656
        %v672 = vadd.s32 %v638, %v656
        %v673 = vadd.s32 %v639, %v656
        %v674 = vadd.s32 %v640, %v656
        %v675 = vadd.s32 %v641, %v656
        %v676 = vadd.s32 %v642, %v656
        %v677 = vadd.s32 %v643, %v656
        %v678 = vadd.s32 %v644, %v656
        %v679 = vadd.s32 %v645, %v656
        %v680 = vadd.s32 %v646, %v656
        %v681 = vadd.s32 %v647, %v656
        %v682 = vadd.s32 %v648, %v656
        %v683 = vadd.s32 %v649, %v656
        %v684 = vadd.s32 %v650, %v656
        %v685 = vadd.s32 %v651, %v656
        %v686 = vadd.s32 %v652, %v656
        %v687 = vadd.s32 %v653, %v656
        %v688 = vadd.s32 %v654, %v656
        %v689 = vshrl.u32 %v657, 16
        %v690 = vshrl.u32 %v658, 16
        %v691 = vshrl.u32 %v659, 16
        %v692 = vshrl.u32 %v660, 16
        %v693 = vshrl.u32 %v661, 16
        %v694 = vshrl.u32 %v662, 16
        %v695 = vshrl.u32 %v663, 16
        %v696 = vshrl.u32 %v664, 16
        %v697 = vshrl.u32 %v665, 16
        %v698 = vshrl.u32 %v666, 16
        %v699 = vshrl.u32 %v667, 16
        %v700 = vshrl.u32 %v668, 16
        %v701 = vshrl.u32 %v669, 16
        %v702 = vshrl.u32 %v670, 16
        %v703 = vshrl.u32 %v671, 16
        %v704 = vshrl.u32 %v672, 16
        %v705 = vshrl.u32 %v673, 16
        %v706 = vshrl.u32 %v674, 16
        %v707 = vshrl.u32 %v675, 16
        %v708 = vshrl.u32 %v676, 16
        %v709 = vshrl.u32 %v677, 16
        %v710 = vshrl.u32 %v678, 16
        %v711 = vshrl.u32 %v679, 16
        %v712 = vshrl.u32 %v680, 16
        %v713 = vshrl.u32 %v681, 16
        %v714 = vshrl.u32 %v682, 16
        %v715 = vshrl.u32 %v683, 16
        %v716 = vshrl.u32 %v684, 16
        %v717 = vshrl.u32 %v685, 16
        %v718 = vshrl.u32 %v686, 16
        %v719 = vshrl.u32 %v687, 16
        %v720 = vshrl.u32 %v688, 16
        %v721 = vxor.u32 %v657, %v689
        %v722 = vxor.u32 %v658, %v690
        %v723 = vxor.u32 %v659, %v691
        %v724 = vxor.u32 %v660, %v692
        %v725 = vxor.u32 %v661, %v693
        %v726 = vxor.u32 %v662, %v694
        %v727 = vxor.u32 %v663, %v695
        %v728 = vxor.u32 %v664, %v696
        %v729 = vxor.u32 %v665, %v697
        %v730 = vxor.u32 %v666, %v698
        %v731 = vxor.u32 %v667, %v699
        %v732 = vxor.u32 %v668, %v700
        %v733 = vxor.u32 %v669, %v701
        %v734 = vxor.u32 %v670, %v702
        %v735 = vxor.u32 %v671, %v703
        %v736 = vxor.u32 %v672, %v704
        %v737 = vxor.u32 %v673, %v705
        %v738 = vxor.u32 %v674, %v706
        %v739 = vxor.u32 %v675, %v707
        %v740 = vxor.u32 %v676, %v708
        %v741 = vxor.u32 %v677, %v709
        %v742 = vxor.u32 %v678, %v710
        %v743 = vxor.u32 %v679, %v711
        %v744 = vxor.u32 %v680, %v712
        %v745 = vxor.u32 %v681, %v713
        %v746 = vxor.u32 %v682, %v714
        %v747 = vxor.u32 %v683, %v715
        %v748 = vxor.u32 %v684, %v716
        %v749 = vxor.u32 %v685, %v717
        %v750 = vxor.u32 %v686, %v718
        %v751 = vxor.u32 %v687, %v719
        %v752 = vxor.u32 %v688, %v720
        %v753 = vmul.u32 %v721, 2146121005
        %v754 = vmul.u32 %v722, 2146121005
        %v755 = vmul.u32 %v723, 2146121005
        %v756 = vmul.u32 %v724, 2146121005
        %v757 = vmul.u32 %v725, 2146121005
        %v758 = vmul.u32 %v726, 2146121005
        %v759 = vmul.u32 %v727, 2146121005
        %v760 = vmul.u32 %v728, 2146121005
        %v761 = vmul.u32 %v729, 2146121005
        %v762 = vmul.u32 %v730, 2146121005
        %v763 = vmul.u32 %v731, 2146121005
        %v764 = vmul.u32 %v732, 2146121005
        %v765 = vmul.u32 %v733, 2146121005
        %v766 = vmul.u32 %v734, 2146121005
        %v767 = vmul.u32 %v735, 2146121005
        %v768 = vmul.u32 %v736, 2146121005
        %v769 = vmul.u32 %v737, 2146121005
        %v770 = vmul.u32 %v738, 2146121005
        %v771 = vmul.u32 %v739, 2146121005
        %v772 = vmul.u32 %v740, 2146121005
        %v773 = vmul.u32 %v741, 2146121005
        %v774 = vmul.u32 %v742, 2146121005
        %v775 = vmul.u32 %v743, 2146121005
        %v776 = vmul.u32 %v744, 2146121005
        %v777 = vmul.u32 %v745, 2146121005
        %v778 = vmul.u32 %v746, 2146121005
        %v779 = vmul.u32 %v747, 2146121005
        %v780 = vmul.u32 %v748, 2146121005
        %v781 = vmul.u32 %v749, 2146121005
        %v782 = vmul.u32 %v750, 2146121005
        %v783 = vmul.u32 %v751, 2146121005
        %v784 = vmul.u32 %v752, 2146121005
        %v785 = vshrl.u32 %v753, 15
        %v786 = vshrl.u32 %v754, 15
        %v787 = vshrl.u32 %v755, 15
        %v788 = vshrl.u32 %v756, 15
        %v789 = vshrl.u32 %v757, 15
        %v790 = vshrl.u32 %v758, 15
        %v791 = vshrl.u32 %v759, 15
        %v792 = vshrl.u32 %v760, 15
        %v793 = vshrl.u32 %v761, 15
        %v794 = vshrl.u32 %v762, 15
        %v795 = vshrl.u32 %v763, 15
        %v796 = vshrl.u32 %v764, 15
        %v797 = vshrl.u32 %v765, 15
        %v798 = vshrl.u32 %v766, 15
        %v799 = vshrl.u32 %v767, 15
        %v800 = vshrl.u32 %v768, 15
        %v801 = vshrl.u32 %v769, 15
        %v802 = vshrl.u32 %v770, 15
        %v803 = vshrl.u32 %v771, 15
        %v804 = vshrl.u32 %v772, 15
        %v805 = vshrl.u32 %v773, 15
        %v806 = vshrl.u32 %v774, 15
        %v807 = vshrl.u32 %v775, 15
        %v808 = vshrl.u32 %v776, 15
        %v809 = vshrl.u32 %v777, 15
        %v810 = vshrl.u32 %v778, 15
        %v811 = vshrl.u32 %v779, 15
        %v812 = vshrl.u32 %v780, 15
        %v813 = vshrl.u32 %v781, 15
        %v814 = vshrl.u32 %v782, 15
        %v815 = vshrl.u32 %v783, 15
        %v816 = vshrl.u32 %v784, 15
        %v817 = vxor.u32 %v753, %v785
        %v818 = vxor.u32 %v754, %v786
        %v819 = vxor.u32 %v755, %v787
        %v820 = vxor.u32 %v756, %v788
        %v821 = vxor.u32 %v757, %v789
        %v822 = vxor.u32 %v758, %v790
        %v823 = vxor.u32 %v759, %v791
        %v824 = vxor.u32 %v760, %v792
        %v825 = vxor.u32 %v761, %v793
        %v826 = vxor.u32 %v762, %v794
        %v827 = vxor.u32 %v763, %v795
        %v828 = vxor.u32 %v764, %v796
        %v829 = vxor.u32 %v765, %v797
        %v830 = vxor.u32 %v766, %v798
        %v831 = vxor.u32 %v767, %v799
        %v832 = vxor.u32 %v768, %v800
        %v833 = vxor.u32 %v769, %v801
        %v834 = vxor.u32 %v770, %v802
        %v835 = vxor.u32 %v771, %v803
        %v836 = vxor.u32 %v772, %v804
        %v837 = vxor.u32 %v773, %v805
        %v838 = vxor.u32 %v774, %v806
        %v839 = vxor.u32 %v775, %v807
        %v840 = vxor.u32 %v776, %v808
        %v841 = vxor.u32 %v777, %v809
        %v842 = vxor.u32 %v778, %v810
        %v843 = vxor.u32 %v779, %v811
        %v844 = vxor.u32 %v780, %v812
        %v845 = vxor.u32 %v781, %v813
        %v846 = vxor.u32 %v782, %v814
        %v847 = vxor.u32 %v783, %v815
        %v848 = vxor.u32 %v784, %v816
        %v849 = vmul.u32 %v817, 2221713035
        %v850 = vmul.u32 %v818, 2221713035
        %v851 = vmul.u32 %v819, 2221713035
        %v852 = vmul.u32 %v820, 2221713035
        %v853 = vmul.u32 %v821, 2221713035
        %v854 = vmul.u32 %v822, 2221713035
        %v855 = vmul.u32 %v823, 2221713035
        %v856 = vmul.u32 %v824, 2221713035
        %v857 = vmul.u32 %v825, 2221713035
        %v858 = vmul.u32 %v826, 2221713035
        %v859 = vmul.u32 %v827, 2221713035
        %v860 = vmul.u32 %v828, 2221713035
        %v861 = vmul.u32 %v829, 2221713035
        %v862 = vmul.u32 %v830, 2221713035
        %v863 = vmul.u32 %v831, 2221713035
        %v864 = vmul.u32 %v832, 2221713035
        %v865 = vmul.u32 %v833, 2221713035
        %v866 = vmul.u32 %v834, 2221713035
        %v867 = vmul.u32 %v835, 2221713035
        %v868 = vmul.u32 %v836, 2221713035
        %v869 = vmul.u32 %v837, 2221713035
        %v870 = vmul.u32 %v838, 2221713035
        %v871 = vmul.u32 %v839, 2221713035
        %v872 = vmul.u32 %v840, 2221713035
        %v873 = vmul.u32 %v841, 2221713035
        %v874 = vmul.u32 %v842, 2221713035
        %v875 = vmul.u32 %v843, 2221713035
        %v876 = vmul.u32 %v844, 2221713035
        %v877 = vmul.u32 %v845, 2221713035
        %v878 = vmul.u32 %v846, 2221713035
        %v879 = vmul.u32 %v847, 2221713035
        %v880 = vmul.u32 %v848, 2221713035
        %v881 = vshrl.u32 %v849, 16
        %v882 = vshrl.u32 %v850, 16
        %v883 = vshrl.u32 %v851, 16
        %v884 = vshrl.u32 %v852, 16
        %v885 = vshrl.u32 %v853, 16
        %v886 = vshrl.u32 %v854, 16
        %v887 = vshrl.u32 %v855, 16
        %v888 = vshrl.u32 %v856, 16
        %v889 = vshrl.u32 %v857, 16
        %v890 = vshrl.u32 %v858, 16
        %v891 = vshrl.u32 %v859, 16
        %v892 = vshrl.u32 %v860, 16
        %v893 = vshrl.u32 %v861, 16
        %v894 = vshrl.u32 %v862, 16
        %v895 = vshrl.u32 %v863, 16
        %v896 = vshrl.u32 %v864, 16
        %v897 = vshrl.u32 %v865, 16
        %v898 = vshrl.u32 %v866, 16
        %v899 = vshrl.u32 %v867, 16
        %v900 = vshrl.u32 %v868, 16
        %v901 = vshrl.u32 %v869, 16
        %v902 = vshrl.u32 %v870, 16
        %v903 = vshrl.u32 %v871, 16
        %v904 = vshrl.u32 %v872, 16
        %v905 = vshrl.u32 %v873, 16
        %v906 = vshrl.u32 %v874, 16
        %v907 = vshrl.u32 %v875, 16
        %v908 = vshrl.u32 %v876, 16
        %v909 = vshrl.u32 %v877, 16
        %v910 = vshrl.u32 %v878, 16
        %v911 = vshrl.u32 %v879, 16
        %v912 = vshrl.u32 %v880, 16
        %v913 = vxor.u32 %v849, %v881
        %v914 = vxor.u32 %v850, %v882
        %v915 = vxor.u32 %v851, %v883
        %v916 = vxor.u32 %v852, %v884
        %v917 = vxor.u32 %v853, %v885
        %v918 = vxor.u32 %v854, %v886
        %v919 = vxor.u32 %v855, %v887
        %v920 = vxor.u32 %v856, %v888
        %v921 = vxor.u32 %v857, %v889
        %v922 = vxor.u32 %v858, %v890
        %v923 = vxor.u32 %v859, %v891
        %v924 = vxor.u32 %v860, %v892
        %v925 = vxor.u32 %v861, %v893
        %v926 = vxor.u32 %v862, %v894
        %v927 = vxor.u32 %v863, %v895
        %v928 = vxor.u32 %v864, %v896
        %v929 = vxor.u32 %v865, %v897
        %v930 = vxor.u32 %v866, %v898
        %v931 = vxor.u32 %v867, %v899
        %v932 = vxor.u32 %v868, %v900
        %v933 = vxor.u32 %v869, %v901
        %v934 = vxor.u32 %v870, %v902
        %v935 = vxor.u32 %v871, %v903
        %v936 = vxor.u32 %v872, %v904
        %v937 = vxor.u32 %v873, %v905
        %v938 = vxor.u32 %v874, %v906
        %v939 = vxor.u32 %v875, %v907
        %v940 = vxor.u32 %v876, %v908
        %v941 = vxor.u32 %v877, %v909
        %v942 = vxor.u32 %v878, %v910
        %v943 = vxor.u32 %v879, %v911
        %v944 = vxor.u32 %v880, %v912
        %v945 = vand.u32 %v913, 1
        %v946 = vand.u32 %v914, 1
        %v947 = vand.u32 %v915, 1
        %v948 = vand.u32 %v916, 1
        %v949 = vand.u32 %v917, 1
        %v950 = vand.u32 %v918, 1
        %v951 = vand.u32 %v919, 1
        %v952 = vand.u32 %v920, 1
        %v953 = vand.u32 %v921, 1
        %v954 = vand.u32 %v922, 1
        %v955 = vand.u32 %v923, 1
        %v956 = vand.u32 %v924, 1
        %v957 = vand.u32 %v925, 1
        %v958 = vand.u32 %v926, 1
        %v959 = vand.u32 %v927, 1
        %v960 = vand.u32 %v928, 1
        %v961 = vand.u32 %v929, 1
        %v962 = vand.u32 %v930, 1
        %v963 = vand.u32 %v931, 1
        %v964 = vand.u32 %v932, 1
        %v965 = vand.u32 %v933, 1
        %v966 = vand.u32 %v934, 1
        %v967 = vand.u32 %v935, 1
        %v968 = vand.u32 %v936, 1
        %v969 = vand.u32 %v937, 1
        %v970 = vand.u32 %v938, 1
        %v971 = vand.u32 %v939, 1
        %v972 = vand.u32 %v940, 1
        %v973 = vand.u32 %v941, 1
        %v974 = vand.u32 %v942, 1
        %v975 = vand.u32 %v943, 1
        %v976 = vand.u32 %v944, 1
        %vm977 = vcmp.eq.s32.totalorder %v945, 1
        %vm978 = vcmp.eq.s32.totalorder %v946, 1
        %vm979 = vcmp.eq.s32.totalorder %v947, 1
        %vm980 = vcmp.eq.s32.totalorder %v948, 1
        %vm981 = vcmp.eq.s32.totalorder %v949, 1
        %vm982 = vcmp.eq.s32.totalorder %v950, 1
        %vm983 = vcmp.eq.s32.totalorder %v951, 1
        %vm984 = vcmp.eq.s32.totalorder %v952, 1
        %vm985 = vcmp.eq.s32.totalorder %v953, 1
        %vm986 = vcmp.eq.s32.totalorder %v954, 1
        %vm987 = vcmp.eq.s32.totalorder %v955, 1
        %vm988 = vcmp.eq.s32.totalorder %v956, 1
        %vm989 = vcmp.eq.s32.totalorder %v957, 1
        %vm990 = vcmp.eq.s32.totalorder %v958, 1
        %vm991 = vcmp.eq.s32.totalorder %v959, 1
        %vm992 = vcmp.eq.s32.totalorder %v960, 1
        %vm993 = vcmp.eq.s32.totalorder %v961, 1
        %vm994 = vcmp.eq.s32.totalorder %v962, 1
        %vm995 = vcmp.eq.s32.totalorder %v963, 1
        %vm996 = vcmp.eq.s32.totalorder %v964, 1
        %vm997 = vcmp.eq.s32.totalorder %v965, 1
        %vm998 = vcmp.eq.s32.totalorder %v966, 1
        %vm999 = vcmp.eq.s32.totalorder %v967, 1
        %vm1000 = vcmp.eq.s32.totalorder %v968, 1
        %vm1001 = vcmp.eq.s32.totalorder %v969, 1
        %vm1002 = vcmp.eq.s32.totalorder %v970, 1
        %vm1003 = vcmp.eq.s32.totalorder %v971, 1
        %vm1004 = vcmp.eq.s32.totalorder %v972, 1
        %vm1005 = vcmp.eq.s32.totalorder %v973, 1
        %vm1006 = vcmp.eq.s32.totalorder %v974, 1
        %vm1007 = vcmp.eq.s32.totalorder %v975, 1
        %vm1008 = vcmp.eq.s32.totalorder %v976, 1
        %v1009 = vmul.f32 %v489, 2.0
        %v1010 = vmul.f32 %v490, 2.0
        %v1011 = vmul.f32 %v491, 2.0
        %v1012 = vmul.f32 %v492, 2.0
        %v1013 = vmul.f32 %v493, 2.0
        %v1014 = vmul.f32 %v494, 2.0
        %v1015 = vmul.f32 %v495, 2.0
        %v1016 = vmul.f32 %v496, 2.0
        %v1017 = vmul.f32 %v497, 2.0
        %v1018 = vmul.f32 %v498, 2.0
        %v1019 = vmul.f32 %v499, 2.0
        %v1020 = vmul.f32 %v500, 2.0
        %v1021 = vmul.f32 %v501, 2.0
        %v1022 = vmul.f32 %v502, 2.0
        %v1023 = vmul.f32 %v503, 2.0
        %v1024 = vmul.f32 %v504, 2.0
        %v1025 = vmul.f32 %v505, 2.0
        %v1026 = vmul.f32 %v506, 2.0
        %v1027 = vmul.f32 %v507, 2.0
        %v1028 = vmul.f32 %v508, 2.0
        %v1029 = vmul.f32 %v509, 2.0
        %v1030 = vmul.f32 %v510, 2.0
        %v1031 = vmul.f32 %v511, 2.0
        %v1032 = vmul.f32 %v512, 2.0
        %v1033 = vmul.f32 %v513, 2.0
        %v1034 = vmul.f32 %v514, 2.0
        %v1035 = vmul.f32 %v515, 2.0
        %v1036 = vmul.f32 %v516, 2.0
        %v1037 = vmul.f32 %v517, 2.0
        %v1038 = vmul.f32 %v518, 2.0
        %v1039 = vmul.f32 %v519, 2.0
        %v1040 = vmul.f32 %v520, 2.0
        %v1041 = vsel %vm977, %v1009, 0.0
        %v1042 = vsel %vm978, %v1010, 0.0
        %v1043 = vsel %vm979, %v1011, 0.0
        %v1044 = vsel %vm980, %v1012, 0.0
        %v1045 = vsel %vm981, %v1013, 0.0
        %v1046 = vsel %vm982, %v1014, 0.0
        %v1047 = vsel %vm983, %v1015, 0.0
        %v1048 = vsel %vm984, %v1016, 0.0
        %v1049 = vsel %vm985, %v1017, 0.0
        %v1050 = vsel %vm986, %v1018, 0.0
        %v1051 = vsel %vm987, %v1019, 0.0
        %v1052 = vsel %vm988, %v1020, 0.0
        %v1053 = vsel %vm989, %v1021, 0.0
        %v1054 = vsel %vm990, %v1022, 0.0
        %v1055 = vsel %vm991, %v1023, 0.0
        %v1056 = vsel %vm992, %v1024, 0.0
        %v1057 = vsel %vm993, %v1025, 0.0
        %v1058 = vsel %vm994, %v1026, 0.0
        %v1059 = vsel %vm995, %v1027, 0.0
        %v1060 = vsel %vm996, %v1028, 0.0
        %v1061 = vsel %vm997, %v1029, 0.0
        %v1062 = vsel %vm998, %v1030, 0.0
        %v1063 = vsel %vm999, %v1031, 0.0
        %v1064 = vsel %vm1000, %v1032, 0.0
        %v1065 = vsel %vm1001, %v1033, 0.0
        %v1066 = vsel %vm1002, %v1034, 0.0
        %v1067 = vsel %vm1003, %v1035, 0.0
        %v1068 = vsel %vm1004, %v1036, 0.0
        %v1069 = vsel %vm1005, %v1037, 0.0
        %v1070 = vsel %vm1006, %v1038, 0.0
        %v1071 = vsel %vm1007, %v1039, 0.0
        %v1072 = vsel %vm1008, %v1040, 0.0
        %v1073 = vpack.c.bf16 %v1042, %v1041
        %v1074 = vpack.c.bf16 %v1044, %v1043
        %v1075 = vpack.c.bf16 %v1046, %v1045
        %v1076 = vpack.c.bf16 %v1048, %v1047
        %v1077 = vpack.c.bf16 %v1050, %v1049
        %v1078 = vpack.c.bf16 %v1052, %v1051
        %v1079 = vpack.c.bf16 %v1054, %v1053
        %v1080 = vpack.c.bf16 %v1056, %v1055
        %v1081 = vpack.c.bf16 %v1058, %v1057
        %v1082 = vpack.c.bf16 %v1060, %v1059
        %v1083 = vpack.c.bf16 %v1062, %v1061
        %v1084 = vpack.c.bf16 %v1064, %v1063
        %v1085 = vpack.c.bf16 %v1066, %v1065
        %v1086 = vpack.c.bf16 %v1068, %v1067
        %v1087 = vpack.c.bf16 %v1070, %v1069
        %v1088 = vpack.c.bf16 %v1072, %v1071
        %v1105 = vunpack.c.l.b16 %v1073
        %v1106 = vunpack.c.h.b16 %v1073
        %v1107 = vunpack.c.l.b16 %v1074
        %v1108 = vunpack.c.h.b16 %v1074
        %v1109 = vunpack.c.l.b16 %v1075
        %v1110 = vunpack.c.h.b16 %v1075
        %v1111 = vunpack.c.l.b16 %v1076
        %v1112 = vunpack.c.h.b16 %v1076
        %v1113 = vunpack.c.l.b16 %v1077
        %v1114 = vunpack.c.h.b16 %v1077
        %v1115 = vunpack.c.l.b16 %v1078
        %v1116 = vunpack.c.h.b16 %v1078
        %v1117 = vunpack.c.l.b16 %v1079
        %v1118 = vunpack.c.h.b16 %v1079
        %v1119 = vunpack.c.l.b16 %v1080
        %v1120 = vunpack.c.h.b16 %v1080
        %v1121 = vunpack.c.l.b16 %v1081
        %v1122 = vunpack.c.h.b16 %v1081
        %v1123 = vunpack.c.l.b16 %v1082
        %v1124 = vunpack.c.h.b16 %v1082
        %v1125 = vunpack.c.l.b16 %v1083
        %v1126 = vunpack.c.h.b16 %v1083
        %v1127 = vunpack.c.l.b16 %v1084
        %v1128 = vunpack.c.h.b16 %v1084
        %v1129 = vunpack.c.l.b16 %v1085
        %v1130 = vunpack.c.h.b16 %v1085
        %v1131 = vunpack.c.l.b16 %v1086
        %v1132 = vunpack.c.h.b16 %v1086
        %v1133 = vunpack.c.l.b16 %v1087
        %v1134 = vunpack.c.h.b16 %v1087
        %v1135 = vunpack.c.l.b16 %v1088
        %v1136 = vunpack.c.h.b16 %v1088
        %v1137 = vpack.c.b16 %v1105, %v1105
        %v1138 = vpack.c.b16 %v1106, %v1106
        %v1139 = vpack.c.b16 %v1107, %v1107
        %v1140 = vpack.c.b16 %v1108, %v1108
        %v1141 = vpack.c.b16 %v1109, %v1109
        %v1142 = vpack.c.b16 %v1110, %v1110
        %v1143 = vpack.c.b16 %v1111, %v1111
        %v1144 = vpack.c.b16 %v1112, %v1112
        %v1145 = vpack.c.b16 %v1113, %v1113
        %v1146 = vpack.c.b16 %v1114, %v1114
        %v1147 = vpack.c.b16 %v1115, %v1115
        %v1148 = vpack.c.b16 %v1116, %v1116
        %v1149 = vpack.c.b16 %v1117, %v1117
        %v1150 = vpack.c.b16 %v1118, %v1118
        %v1151 = vpack.c.b16 %v1119, %v1119
        %v1152 = vpack.c.b16 %v1120, %v1120
        %v1153 = vpack.c.b16 %v1121, %v1121
        %v1154 = vpack.c.b16 %v1122, %v1122
        %v1155 = vpack.c.b16 %v1123, %v1123
        %v1156 = vpack.c.b16 %v1124, %v1124
        %v1157 = vpack.c.b16 %v1125, %v1125
        %v1158 = vpack.c.b16 %v1126, %v1126
        %v1159 = vpack.c.b16 %v1127, %v1127
        %v1160 = vpack.c.b16 %v1128, %v1128
        %v1161 = vpack.c.b16 %v1129, %v1129
        %v1162 = vpack.c.b16 %v1130, %v1130
        %v1163 = vpack.c.b16 %v1131, %v1131
        %v1164 = vpack.c.b16 %v1132, %v1132
        %v1165 = vpack.c.b16 %v1133, %v1133
        %v1166 = vpack.c.b16 %v1134, %v1134
        %v1167 = vpack.c.b16 %v1135, %v1135
        %v1168 = vpack.c.b16 %v1136, %v1136
        %1201 = vst [vmem:[%s205] sm:$0xf] %v1137
        %1202 = vst [vmem:[%s205 + $0x4] sm:$0xf] %v1138
        %1203 = vst [vmem:[%s205 + $0x8] sm:$0xf] %v1139
        %1204 = vst [vmem:[%s205 + $0xc] sm:$0xf] %v1140
        %1205 = vst [vmem:[%s205 + $0x10] sm:$0xf] %v1141
        %1206 = vst [vmem:[%s205 + $0x14] sm:$0xf] %v1142
        %1207 = vst [vmem:[%s205 + $0x18] sm:$0xf] %v1143
        %1208 = vst [vmem:[%s205 + $0x1c] sm:$0xf] %v1144
        %1209 = vst [vmem:[%s205 + $0x20] sm:$0xf] %v1145
        %1210 = vst [vmem:[%s205 + $0x24] sm:$0xf] %v1146
        %1211 = vst [vmem:[%s205 + $0x28] sm:$0xf] %v1147
        %1212 = vst [vmem:[%s205 + $0x2c] sm:$0xf] %v1148
        %1213 = vst [vmem:[%s205 + $0x30] sm:$0xf] %v1149
        %1214 = vst [vmem:[%s205 + $0x34] sm:$0xf] %v1150
        %1215 = vst [vmem:[%s205 + $0x38] sm:$0xf] %v1151
        %1216 = vst [vmem:[%s205 + $0x3c] sm:$0xf] %v1152
        %1217 = vst [vmem:[%s205 + $0x40] sm:$0xf] %v1153
        %1218 = vst [vmem:[%s205 + $0x44] sm:$0xf] %v1154
        %1219 = vst [vmem:[%s205 + $0x48] sm:$0xf] %v1155
        %1220 = vst [vmem:[%s205 + $0x4c] sm:$0xf] %v1156
        %1221 = vst [vmem:[%s205 + $0x50] sm:$0xf] %v1157
        %1222 = vst [vmem:[%s205 + $0x54] sm:$0xf] %v1158
        %1223 = vst [vmem:[%s205 + $0x58] sm:$0xf] %v1159
        %1224 = vst [vmem:[%s205 + $0x5c] sm:$0xf] %v1160
        %1225 = vst [vmem:[%s205 + $0x60] sm:$0xf] %v1161
        %1226 = vst [vmem:[%s205 + $0x64] sm:$0xf] %v1162
        %1227 = vst [vmem:[%s205 + $0x68] sm:$0xf] %v1163
        %1228 = vst [vmem:[%s205 + $0x6c] sm:$0xf] %v1164
        %1229 = vst [vmem:[%s205 + $0x70] sm:$0xf] %v1165
        %1230 = vst [vmem:[%s205 + $0x74] sm:$0xf] %v1166
        %1231 = vst [vmem:[%s205 + $0x78] sm:$0xf] %v1167
        %1232 = vst [vmem:[%s205 + $0x7c] sm:$0xf] %v1168
        %s1233 = sand.u32 %s99, 1
        %s1234 = scalar_lea.sflag [#allocation6], %s1233
        %s1235 = sand.u32 %s99, 1
        %s1236 = smul.addr %s1235, 128
        %s1237 = scalar_lea.vmem [#allocation9], %s1236
        // Predicated region
        $region41: #{tpu_custom_call.1} parent=31 // pred_check
          %p1238 = pneg %p109
        $region42: #{tpu_custom_call.1} parent=31 // pred_check_branch
          %1240 = sbr.rel (%p1238) target = $region44
        $region43: #{tpu_custom_call.1} parent=31 // pred_region
          %s1241 = smul.u32 32, %s23
          %s1243 = ssub.s32 2048, 2048
          %1244 = vsyncadd %s1234, %s1243
          %s1245 = smul.addr %s1241, 64
          %s1246 = scalar_lea.hbm %s4, %s1245
          %s1247 = sshll.u32 %s1237, 4
          %s1248 = int_to_ptr.vmem [resolvable:$true] %s1247
          %1253 = dma.vmem_to_hbm [thread:$0]  %s1248, 2048, %s1246, %s1234, 64, 64, 4
        $region44: #{tpu_custom_call.1} parent=31 // pred_fallthru
          _
      $region32: #{tpu_custom_call.1} parent=5 // pred_fallthru
        _
      %p1254 = scmp.le.s32.totalorder 2, %s18
      // Predicated region
      $region45: #{tpu_custom_call.1} parent=5 // pred_check
        %p1255 = pneg %p1254
      $region46: #{tpu_custom_call.1} parent=5 // pred_check_branch
        %1257 = sbr.rel (%p1255) target = $region48
      $region47: #{tpu_custom_call.1} parent=5 // pred_region
        %s1258 = ssub.s32 %s18, 2
        // Predicated region
        $region49: #{tpu_custom_call.1} parent=47 // pred_check
          %p1259 = pneg %p115
        $region50: #{tpu_custom_call.1} parent=47 // pred_check_branch
          %1261 = sbr.rel (%p1259) target = $region52
        $region51: #{tpu_custom_call.1} parent=47 // pred_region
          %s1262 = sand.u32 %s100, 1
          %s1263 = scalar_lea.sflag [#allocation6], %s1262
          %s1264 = sand.u32 %s100, 1
          %s1265 = smul.addr %s1264, 128
          %s1266 = scalar_lea.vmem [#allocation9], %s1265
          %1267 = dma.done %s1263, 2048
        $region52: #{tpu_custom_call.1} parent=47 // pred_fallthru
          _
      $region48: #{tpu_custom_call.1} parent=5 // pred_fallthru
        _
    $region6: #{tpu_custom_call.1} parent=1 // loop_footer
      %s22 = sadd.s32 1, %s18
    $region7: #{tpu_custom_call.1} parent=1 // loop_footer_branch
      %17 = sbr.rel target = $region3
    $region8: #{tpu_custom_call.1} parent=1 // loop_exit
      _
    %1268 = vsyncpa [#allocation5], 1
    %s1269 = scalar_lea.sflag [#allocation5], 1
    %1270 = vsyncpa %s1269, 1
    %1271 = vsyncpa [#allocation8], 1
    %1272 = vsyncpa [#allocation6], 1
    %s1273 = scalar_lea.sflag [#allocation6], 1
    %1274 = vsyncpa %s1273, 1

</llo_original>
